<compile_context>
chip_gen: v7x
topology: tpu7x:2x2x1
jax: 0.10.0
libtpu: 0.0.40
codegen_flags: <defaults>
</compile_context>

<pallas_src>
import jax
import jax.numpy as jnp
from jax import lax
from jax.experimental import pallas as pl
from jax.experimental.pallas import tpu as pltpu

BP = 8  # padded batch rows per time step (one full sublane group)


# ------------------------- Pallas kernel -------------------------

def lstm_classifier_kernel(tok_ref,        # (T*BP, 1) int32 token ids, time-major, batch padded to BP rows/step
                           embproj_f_ref,  # (V, 4H)  bf16  embedding @ W_ih_fwd^T (fused gather+projection table)
                           whh_f_ref,      # (H, 4H)  bf16  forward W_hh^T
                           b_f_ref,        # (1, 4H)  f32   forward b_ih + b_hh
                           embproj_b_ref,  # (V, 4H)  bf16  embedding @ W_ih_bwd^T
                           b_b_ref,        # (1, 4H)  f32   backward b_ih + b_hh
                           fcw_ref,        # (1, 2H)  f32   fc weight, lane-major
                           fcb_ref,        # (1, 1)   f32   fc bias
                           out_ref):       # (B, 1)   f32   sigmoid(logits)
    B = out_ref.shape[0]
    TBp = tok_ref.shape[0]
    T = TBp // BP
    V = embproj_f_ref.shape[0]
    H4 = embproj_f_ref.shape[1]
    H = H4 // 4

    # ---- one-hot(tokens) in bf16 (0/1 exact); padded rows hold token 0 and are never read ----
    iota_v = lax.broadcasted_iota(jnp.int32, (TBp, V), 1)
    onehot = jnp.where(tok_ref[...] == iota_v, 1.0, 0.0).astype(jnp.bfloat16)     # (T*BP, V)

    # ---- fused embedding-gather + input projection for the whole sequence (ONE matmul),
    #      bias folded in once, hoisted out of the recurrence ----
    xp = jnp.dot(onehot, embproj_f_ref[...],
                 preferred_element_type=jnp.float32) + b_f_ref[...]               # (T*BP, 4H) f32

    whh_f = whh_f_ref[...]                                                        # (H, 4H) bf16

    h = jnp.zeros((BP, H), jnp.float32)
    c = jnp.zeros((BP, H), jnp.float32)

    # ---- forward recurrence, fully unrolled (T static). PyTorch gate order: i, f, g, o.
    #      Only the MXU operands are bf16; all gate/elementwise math stays f32. ----
    for t in range(T):
        gates = xp[t * BP:(t + 1) * BP, :] + jnp.dot(                             # sublane-aligned slice
            h.astype(jnp.bfloat16), whh_f, preferred_element_type=jnp.float32)    # (BP, 4H)
        sig = jax.nn.sigmoid(gates)          # one full-width EUP push
        th = jnp.tanh(gates)                 # one full-width EUP push
        i_g = sig[:, 0 * H:1 * H]
        f_g = sig[:, 1 * H:2 * H]
        g_g = th[:, 2 * H:3 * H]
        o_g = sig[:, 3 * H:4 * H]
        c = f_g * c + i_g * g_g
        h = o_g * jnp.tanh(c)
    h_fwd = h                                                                     # (BP, H)

    # ---- backward direction: output[:, -1, H:] is the bwd FIRST step on x[:, -1] with zero
    #      initial state, so the h0 @ W_hh_bwd term (and W_hh_bwd itself) vanish entirely. ----
    onehot_last = onehot[(T - 1) * BP:T * BP, :]                                  # (BP, V), aligned
    gates_b = jnp.dot(onehot_last, embproj_b_ref[...],
                      preferred_element_type=jnp.float32) + b_b_ref[...]          # (BP, 4H)
    sig_b = jax.nn.sigmoid(gates_b)
    i_b = sig_b[:, 0 * H:1 * H]
    o_b = sig_b[:, 3 * H:4 * H]
    g_b = jnp.tanh(gates_b[:, 2 * H:3 * H])
    h_bwd = o_b * jnp.tanh(i_b * g_b)                                             # (BP, H), c0 == 0

    # ---- fc + sigmoid (dropout p=0 / eval mode is identity), VPU tail (no N=1 MXU matmul) ----
    fcw = fcw_ref[...]                                                            # (1, 2H)
    logits = (jnp.sum(h_fwd * fcw[:, :H], axis=-1, keepdims=True)
              + jnp.sum(h_bwd * fcw[:, H:], axis=-1, keepdims=True)
              + fcb_ref[...])                                                     # (BP, 1)
    out_ref[...] = jax.nn.sigmoid(logits)[:B, :]


# ------------------------- parameter folding (one-time, outside jit) -------------------------

def prepare_kernel_params(params):
    """Fold embedding @ W_ih into a (V, 4H) lookup-projection table per direction, pre-cast
    the MXU operands to bf16, and lay the fc weight out lane-major. W_hh_bwd is not needed."""
    emb = params["embedding"].astype(jnp.float32)
    return {
        "emb_proj_f": (emb @ params["wih_f"]).astype(jnp.bfloat16),   # (V, 4H)
        "whh_f":      params["whh_f"].astype(jnp.bfloat16),           # (H, 4H)
        "b_f":        params["b_f"],                                  # (1, 4H)
        "emb_proj_b": (emb @ params["wih_b"]).astype(jnp.bfloat16),   # (V, 4H)
        "b_b":        params["b_b"],                                  # (1, 4H)
        "fc_w":       jnp.transpose(params["fc_w"]),                  # (1, 2H) lane-major
        "fc_b":       params["fc_b"],                                 # (1, 1)
    }


# ------------------------- wrapper -------------------------

def text_classifier_forward(tokens, kp):
    """tokens: (B, T) int32.  kp: prepare_kernel_params(...) output.  Returns (B, 1) f32 probs."""
    B, T = tokens.shape
    # Tiny (256-byte) time-major, sublane-padded token layout: row t*BP + b = tokens[b, t],
    # filler rows use token 0 (valid id; their xp rows are never consumed).
    tok_pad = jnp.zeros((BP, T), jnp.int32).at[:B, :].set(tokens.astype(jnp.int32))
    tok_tm = jnp.transpose(tok_pad).reshape(T * BP, 1)

    args = (
        tok_tm,
        kp["emb_proj_f"], kp["whh_f"], kp["b_f"],
        kp["emb_proj_b"], kp["b_b"],
        kp["fc_w"], kp["fc_b"],
    )

    V, H4 = kp["emb_proj_f"].shape
    H = H4 // 4
    cost = pl.CostEstimate(
        flops=2 * (T * BP * V * H4 + T * BP * H * H4 + BP * V * H4) + 8 * T * BP * H,
        transcendentals=3 * T * BP * H4,
        bytes_accessed=int(sum(int(a.size) * a.dtype.itemsize for a in args) + B * 4),
    )

    vmem = pl.BlockSpec(memory_space=pltpu.MemorySpace.VMEM)
    return pl.pallas_call(
        lstm_classifier_kernel,
        out_shape=jax.ShapeDtypeStruct((B, 1), jnp.float32),
        in_specs=[vmem] * len(args),
        out_specs=vmem,
        cost_estimate=cost,
    )(*args)
    # TODO(synk): if batch ever grows, add a batch grid axis with dimension_semantics=("parallel",)
    # to shard across v7x's two TensorCores; at B=2 there is nothing to split.


# ------------------------- pure-JAX reference (PyTorch semantics, f32) -------------------------

def reference_forward(tokens, params):
    emb = params["embedding"]
    embedded = jnp.take(emb, tokens, axis=0)          # (B, T, E)
    H = params["whh_f"].shape[0]
    B, T, _ = embedded.shape

    def cell(x_t, h, c, wih, whh, b):
        gates = x_t @ wih + h @ whh + b
        i_g = jax.nn.sigmoid(gates[:, 0 * H:1 * H])
        f_g = jax.nn.sigmoid(gates[:, 1 * H:2 * H])
        g_g = jnp.tanh(gates[:, 2 * H:3 * H])
        o_g = jax.nn.sigmoid(gates[:, 3 * H:4 * H])
        c_new = f_g * c + i_g * g_g
        return o_g * jnp.tanh(c_new), c_new

    h = jnp.zeros((B, H), jnp.float32)
    c = jnp.zeros((B, H), jnp.float32)
    for t in range(T):
        h, c = cell(embedded[:, t, :], h, c,
                    params["wih_f"], params["whh_f"], params["b_f"])
    h_fwd = h

    h0 = jnp.zeros((B, H), jnp.float32)
    c0 = jnp.zeros((B, H), jnp.float32)
    h_bwd, _ = cell(embedded[:, T - 1, :], h0, c0,
                    params["wih_b"], params["whh_b"], params["b_b"])

    last_hidden = jnp.concatenate([h_fwd, h_bwd], axis=1)
    return jax.nn.sigmoid(last_hidden @ params["fc_w"] + params["fc_b"])


# ------------------------- main -------------------------

if __name__ == "__main__":
    # module hyper-parameters
    V, E, H = 50, 16, 32
    B, T = 2, 8

    key = jax.random.PRNGKey(0)
    keys = jax.random.split(key, 10)

    def init(k, shape, scale=0.1):
        return (scale * jax.random.normal(k, shape)).astype(jnp.float32)

    params = {
        "embedding": init(keys[0], (V, E)),
        # LSTM weights stored pre-transposed: (in_features, 4H); biases combined (b_ih + b_hh).
        "wih_f": init(keys[1], (E, 4 * H)),
        "whh_f": init(keys[2], (H, 4 * H)),
        "b_f":   init(keys[3], (1, 4 * H)),
        "wih_b": init(keys[4], (E, 4 * H)),
        "whh_b": init(keys[5], (H, 4 * H)),   # kept for the reference; kernel proves it is unused
        "b_b":   init(keys[6], (1, 4 * H)),
        "fc_w":  init(keys[7], (2 * H, 1)),
        "fc_b":  init(keys[8], (1, 1)),
    }

    tokens = jax.random.randint(keys[9], (B, T), 0, V, dtype=jnp.int32)

    # One-time parameter folding (outside jit): embedding @ W_ih tables, bf16 casts, fc layout.
    kparams = prepare_kernel_params(params)

    fwd = jax.jit(text_classifier_forward)
    out = jax.block_until_ready(fwd(tokens, kparams))

    ref = jax.block_until_ready(reference_forward(tokens, params))
    assert out.shape == (B, 1)
    assert jnp.allclose(out, ref, atol=1e-2, rtol=1e-2), (out, ref)

    print("KERNEL_OK")
</pallas_src>

<mosaic_0001>
module attributes {stable_mosaic.version = 11 : i64} {
  func.func @lstm_classifier_kernel(%arg0: memref<64x1xi32, #tpu.memory_space<vmem>>, %arg1: memref<50x128xbf16, #tpu.memory_space<vmem>>, %arg2: memref<32x128xbf16, #tpu.memory_space<vmem>>, %arg3: memref<1x128xf32, #tpu.memory_space<vmem>>, %arg4: memref<50x128xbf16, #tpu.memory_space<vmem>>, %arg5: memref<1x128xf32, #tpu.memory_space<vmem>>, %arg6: memref<1x64xf32, #tpu.memory_space<vmem>>, %arg7: memref<1x1xf32, #tpu.memory_space<vmem>>, %arg8: memref<2x1xf32, #tpu.memory_space<vmem>>) attributes {dimension_semantics = [], scalar_prefetch = 0 : i64, scratch_operands = 0 : i64, tpu.core_type = #tpu.core_type<tc>} {
    %0 = tpu.iota {dimensions = array<i32: 1>} : vector<64x50xi32>
    %c0 = arith.constant 0 : index
    %c0_0 = arith.constant 0 : index
    %1 = vector.load %arg0[%c0, %c0_0] : memref<64x1xi32, #tpu.memory_space<vmem>>, vector<64x1xi32>
    %2 = vector.broadcast %1 : vector<64x1xi32> to vector<64x50xi32>
    %3 = arith.cmpi eq, %2, %0 : vector<64x50xi32>
    %cst = arith.constant 1.000000e+00 : f32
    %cst_1 = arith.constant 0.000000e+00 : f32
    %4 = vector.broadcast %cst : f32 to vector<64x50xf32>
    %5 = vector.broadcast %cst_1 : f32 to vector<64x50xf32>
    %6 = arith.select %3, %4, %5 : vector<64x50xi1>, vector<64x50xf32>
    %7 = arith.truncf %6 : vector<64x50xf32> to vector<64x50xbf16>
    %c0_2 = arith.constant 0 : index
    %c0_3 = arith.constant 0 : index
    %8 = vector.load %arg1[%c0_2, %c0_3] : memref<50x128xbf16, #tpu.memory_space<vmem>>, vector<50x128xbf16>
    %cst_4 = arith.constant dense<0.000000e+00> : vector<64x128xf32>
    %9 = tpu.matmul %7, %8, %cst_4 {dimension_numbers = #tpu.dot_dimension_numbers<[1], [0], [0], [1], [0, 0, 1, 1], [], []>} : vector<64x50xbf16>, vector<50x128xbf16>, vector<64x128xf32> -> vector<64x128xf32>
    %c0_5 = arith.constant 0 : index
    %c0_6 = arith.constant 0 : index
    %10 = vector.load %arg3[%c0_5, %c0_6] : memref<1x128xf32, #tpu.memory_space<vmem>>, vector<1x128xf32>
    %11 = vector.broadcast %10 : vector<1x128xf32> to vector<64x128xf32>
    %12 = arith.addf %9, %11 : vector<64x128xf32>
    %c0_7 = arith.constant 0 : index
    %c0_8 = arith.constant 0 : index
    %13 = vector.load %arg2[%c0_7, %c0_8] : memref<32x128xbf16, #tpu.memory_space<vmem>>, vector<32x128xbf16>
    %cst_9 = arith.constant 0.000000e+00 : f32
    %14 = vector.broadcast %cst_9 : f32 to vector<8x32xf32>
    %cst_10 = arith.constant 0.000000e+00 : f32
    %15 = vector.broadcast %cst_10 : f32 to vector<8x32xf32>
    %16 = vector.extract_strided_slice %12 {offsets = [0, 0], sizes = [8, 128], strides = [1, 1]} : vector<64x128xf32> to vector<8x128xf32>
    %17 = arith.truncf %14 : vector<8x32xf32> to vector<8x32xbf16>
    %cst_11 = arith.constant dense<0.000000e+00> : vector<8x128xf32>
    %18 = tpu.matmul %17, %13, %cst_11 {dimension_numbers = #tpu.dot_dimension_numbers<[1], [0], [0], [1], [0, 0, 1, 1], [], []>} : vector<8x32xbf16>, vector<32x128xbf16>, vector<8x128xf32> -> vector<8x128xf32>
    %19 = arith.addf %16, %18 : vector<8x128xf32>
    %20 = arith.negf %19 : vector<8x128xf32>
    %21 = math.exp %20 : vector<8x128xf32>
    %cst_12 = arith.constant 1.000000e+00 : f32
    %22 = vector.broadcast %cst_12 : f32 to vector<8x128xf32>
    %23 = arith.addf %22, %21 : vector<8x128xf32>
    %24 = arith.divf %22, %23 : vector<8x128xf32>
    %25 = math.tanh %19 : vector<8x128xf32>
    %26 = vector.extract_strided_slice %24 {offsets = [0, 0], sizes = [8, 32], strides = [1, 1]} : vector<8x128xf32> to vector<8x32xf32>
    %27 = vector.extract_strided_slice %24 {offsets = [0, 32], sizes = [8, 32], strides = [1, 1]} : vector<8x128xf32> to vector<8x32xf32>
    %28 = vector.extract_strided_slice %25 {offsets = [0, 64], sizes = [8, 32], strides = [1, 1]} : vector<8x128xf32> to vector<8x32xf32>
    %29 = vector.extract_strided_slice %24 {offsets = [0, 96], sizes = [8, 32], strides = [1, 1]} : vector<8x128xf32> to vector<8x32xf32>
    %30 = arith.mulf %27, %15 : vector<8x32xf32>
    %31 = arith.mulf %26, %28 : vector<8x32xf32>
    %32 = arith.addf %30, %31 : vector<8x32xf32>
    %33 = math.tanh %32 : vector<8x32xf32>
    %34 = arith.mulf %29, %33 : vector<8x32xf32>
    %35 = vector.extract_strided_slice %12 {offsets = [8, 0], sizes = [8, 128], strides = [1, 1]} : vector<64x128xf32> to vector<8x128xf32>
    %36 = arith.truncf %34 : vector<8x32xf32> to vector<8x32xbf16>
    %cst_13 = arith.constant dense<0.000000e+00> : vector<8x128xf32>
    %37 = tpu.matmul %36, %13, %cst_13 {dimension_numbers = #tpu.dot_dimension_numbers<[1], [0], [0], [1], [0, 0, 1, 1], [], []>} : vector<8x32xbf16>, vector<32x128xbf16>, vector<8x128xf32> -> vector<8x128xf32>
    %38 = arith.addf %35, %37 : vector<8x128xf32>
    %39 = arith.negf %38 : vector<8x128xf32>
    %40 = math.exp %39 : vector<8x128xf32>
    %cst_14 = arith.constant 1.000000e+00 : f32
    %41 = vector.broadcast %cst_14 : f32 to vector<8x128xf32>
    %42 = arith.addf %41, %40 : vector<8x128xf32>
    %43 = arith.divf %41, %42 : vector<8x128xf32>
    %44 = math.tanh %38 : vector<8x128xf32>
    %45 = vector.extract_strided_slice %43 {offsets = [0, 0], sizes = [8, 32], strides = [1, 1]} : vector<8x128xf32> to vector<8x32xf32>
    %46 = vector.extract_strided_slice %43 {offsets = [0, 32], sizes = [8, 32], strides = [1, 1]} : vector<8x128xf32> to vector<8x32xf32>
    %47 = vector.extract_strided_slice %44 {offsets = [0, 64], sizes = [8, 32], strides = [1, 1]} : vector<8x128xf32> to vector<8x32xf32>
    %48 = vector.extract_strided_slice %43 {offsets = [0, 96], sizes = [8, 32], strides = [1, 1]} : vector<8x128xf32> to vector<8x32xf32>
    %49 = arith.mulf %46, %32 : vector<8x32xf32>
    %50 = arith.mulf %45, %47 : vector<8x32xf32>
    %51 = arith.addf %49, %50 : vector<8x32xf32>
    %52 = math.tanh %51 : vector<8x32xf32>
    %53 = arith.mulf %48, %52 : vector<8x32xf32>
    %54 = vector.extract_strided_slice %12 {offsets = [16, 0], sizes = [8, 128], strides = [1, 1]} : vector<64x128xf32> to vector<8x128xf32>
    %55 = arith.truncf %53 : vector<8x32xf32> to vector<8x32xbf16>
    %cst_15 = arith.constant dense<0.000000e+00> : vector<8x128xf32>
    %56 = tpu.matmul %55, %13, %cst_15 {dimension_numbers = #tpu.dot_dimension_numbers<[1], [0], [0], [1], [0, 0, 1, 1], [], []>} : vector<8x32xbf16>, vector<32x128xbf16>, vector<8x128xf32> -> vector<8x128xf32>
    %57 = arith.addf %54, %56 : vector<8x128xf32>
    %58 = arith.negf %57 : vector<8x128xf32>
    %59 = math.exp %58 : vector<8x128xf32>
    %cst_16 = arith.constant 1.000000e+00 : f32
    %60 = vector.broadcast %cst_16 : f32 to vector<8x128xf32>
    %61 = arith.addf %60, %59 : vector<8x128xf32>
    %62 = arith.divf %60, %61 : vector<8x128xf32>
    %63 = math.tanh %57 : vector<8x128xf32>
    %64 = vector.extract_strided_slice %62 {offsets = [0, 0], sizes = [8, 32], strides = [1, 1]} : vector<8x128xf32> to vector<8x32xf32>
    %65 = vector.extract_strided_slice %62 {offsets = [0, 32], sizes = [8, 32], strides = [1, 1]} : vector<8x128xf32> to vector<8x32xf32>
    %66 = vector.extract_strided_slice %63 {offsets = [0, 64], sizes = [8, 32], strides = [1, 1]} : vector<8x128xf32> to vector<8x32xf32>
    %67 = vector.extract_strided_slice %62 {offsets = [0, 96], sizes = [8, 32], strides = [1, 1]} : vector<8x128xf32> to vector<8x32xf32>
    %68 = arith.mulf %65, %51 : vector<8x32xf32>
    %69 = arith.mulf %64, %66 : vector<8x32xf32>
    %70 = arith.addf %68, %69 : vector<8x32xf32>
    %71 = math.tanh %70 : vector<8x32xf32>
    %72 = arith.mulf %67, %71 : vector<8x32xf32>
    %73 = vector.extract_strided_slice %12 {offsets = [24, 0], sizes = [8, 128], strides = [1, 1]} : vector<64x128xf32> to vector<8x128xf32>
    %74 = arith.truncf %72 : vector<8x32xf32> to vector<8x32xbf16>
    %cst_17 = arith.constant dense<0.000000e+00> : vector<8x128xf32>
    %75 = tpu.matmul %74, %13, %cst_17 {dimension_numbers = #tpu.dot_dimension_numbers<[1], [0], [0], [1], [0, 0, 1, 1], [], []>} : vector<8x32xbf16>, vector<32x128xbf16>, vector<8x128xf32> -> vector<8x128xf32>
    %76 = arith.addf %73, %75 : vector<8x128xf32>
    %77 = arith.negf %76 : vector<8x128xf32>
    %78 = math.exp %77 : vector<8x128xf32>
    %cst_18 = arith.constant 1.000000e+00 : f32
    %79 = vector.broadcast %cst_18 : f32 to vector<8x128xf32>
    %80 = arith.addf %79, %78 : vector<8x128xf32>
    %81 = arith.divf %79, %80 : vector<8x128xf32>
    %82 = math.tanh %76 : vector<8x128xf32>
    %83 = vector.extract_strided_slice %81 {offsets = [0, 0], sizes = [8, 32], strides = [1, 1]} : vector<8x128xf32> to vector<8x32xf32>
    %84 = vector.extract_strided_slice %81 {offsets = [0, 32], sizes = [8, 32], strides = [1, 1]} : vector<8x128xf32> to vector<8x32xf32>
    %85 = vector.extract_strided_slice %82 {offsets = [0, 64], sizes = [8, 32], strides = [1, 1]} : vector<8x128xf32> to vector<8x32xf32>
    %86 = vector.extract_strided_slice %81 {offsets = [0, 96], sizes = [8, 32], strides = [1, 1]} : vector<8x128xf32> to vector<8x32xf32>
    %87 = arith.mulf %84, %70 : vector<8x32xf32>
    %88 = arith.mulf %83, %85 : vector<8x32xf32>
    %89 = arith.addf %87, %88 : vector<8x32xf32>
    %90 = math.tanh %89 : vector<8x32xf32>
    %91 = arith.mulf %86, %90 : vector<8x32xf32>
    %92 = vector.extract_strided_slice %12 {offsets = [32, 0], sizes = [8, 128], strides = [1, 1]} : vector<64x128xf32> to vector<8x128xf32>
    %93 = arith.truncf %91 : vector<8x32xf32> to vector<8x32xbf16>
    %cst_19 = arith.constant dense<0.000000e+00> : vector<8x128xf32>
    %94 = tpu.matmul %93, %13, %cst_19 {dimension_numbers = #tpu.dot_dimension_numbers<[1], [0], [0], [1], [0, 0, 1, 1], [], []>} : vector<8x32xbf16>, vector<32x128xbf16>, vector<8x128xf32> -> vector<8x128xf32>
    %95 = arith.addf %92, %94 : vector<8x128xf32>
    %96 = arith.negf %95 : vector<8x128xf32>
    %97 = math.exp %96 : vector<8x128xf32>
    %cst_20 = arith.constant 1.000000e+00 : f32
    %98 = vector.broadcast %cst_20 : f32 to vector<8x128xf32>
    %99 = arith.addf %98, %97 : vector<8x128xf32>
    %100 = arith.divf %98, %99 : vector<8x128xf32>
    %101 = math.tanh %95 : vector<8x128xf32>
    %102 = vector.extract_strided_slice %100 {offsets = [0, 0], sizes = [8, 32], strides = [1, 1]} : vector<8x128xf32> to vector<8x32xf32>
    %103 = vector.extract_strided_slice %100 {offsets = [0, 32], sizes = [8, 32], strides = [1, 1]} : vector<8x128xf32> to vector<8x32xf32>
    %104 = vector.extract_strided_slice %101 {offsets = [0, 64], sizes = [8, 32], strides = [1, 1]} : vector<8x128xf32> to vector<8x32xf32>
    %105 = vector.extract_strided_slice %100 {offsets = [0, 96], sizes = [8, 32], strides = [1, 1]} : vector<8x128xf32> to vector<8x32xf32>
    %106 = arith.mulf %103, %89 : vector<8x32xf32>
    %107 = arith.mulf %102, %104 : vector<8x32xf32>
    %108 = arith.addf %106, %107 : vector<8x32xf32>
    %109 = math.tanh %108 : vector<8x32xf32>
    %110 = arith.mulf %105, %109 : vector<8x32xf32>
    %111 = vector.extract_strided_slice %12 {offsets = [40, 0], sizes = [8, 128], strides = [1, 1]} : vector<64x128xf32> to vector<8x128xf32>
    %112 = arith.truncf %110 : vector<8x32xf32> to vector<8x32xbf16>
    %cst_21 = arith.constant dense<0.000000e+00> : vector<8x128xf32>
    %113 = tpu.matmul %112, %13, %cst_21 {dimension_numbers = #tpu.dot_dimension_numbers<[1], [0], [0], [1], [0, 0, 1, 1], [], []>} : vector<8x32xbf16>, vector<32x128xbf16>, vector<8x128xf32> -> vector<8x128xf32>
    %114 = arith.addf %111, %113 : vector<8x128xf32>
    %115 = arith.negf %114 : vector<8x128xf32>
    %116 = math.exp %115 : vector<8x128xf32>
    %cst_22 = arith.constant 1.000000e+00 : f32
    %117 = vector.broadcast %cst_22 : f32 to vector<8x128xf32>
    %118 = arith.addf %117, %116 : vector<8x128xf32>
    %119 = arith.divf %117, %118 : vector<8x128xf32>
    %120 = math.tanh %114 : vector<8x128xf32>
    %121 = vector.extract_strided_slice %119 {offsets = [0, 0], sizes = [8, 32], strides = [1, 1]} : vector<8x128xf32> to vector<8x32xf32>
    %122 = vector.extract_strided_slice %119 {offsets = [0, 32], sizes = [8, 32], strides = [1, 1]} : vector<8x128xf32> to vector<8x32xf32>
    %123 = vector.extract_strided_slice %120 {offsets = [0, 64], sizes = [8, 32], strides = [1, 1]} : vector<8x128xf32> to vector<8x32xf32>
    %124 = vector.extract_strided_slice %119 {offsets = [0, 96], sizes = [8, 32], strides = [1, 1]} : vector<8x128xf32> to vector<8x32xf32>
    %125 = arith.mulf %122, %108 : vector<8x32xf32>
    %126 = arith.mulf %121, %123 : vector<8x32xf32>
    %127 = arith.addf %125, %126 : vector<8x32xf32>
    %128 = math.tanh %127 : vector<8x32xf32>
    %129 = arith.mulf %124, %128 : vector<8x32xf32>
    %130 = vector.extract_strided_slice %12 {offsets = [48, 0], sizes = [8, 128], strides = [1, 1]} : vector<64x128xf32> to vector<8x128xf32>
    %131 = arith.truncf %129 : vector<8x32xf32> to vector<8x32xbf16>
    %cst_23 = arith.constant dense<0.000000e+00> : vector<8x128xf32>
    %132 = tpu.matmul %131, %13, %cst_23 {dimension_numbers = #tpu.dot_dimension_numbers<[1], [0], [0], [1], [0, 0, 1, 1], [], []>} : vector<8x32xbf16>, vector<32x128xbf16>, vector<8x128xf32> -> vector<8x128xf32>
    %133 = arith.addf %130, %132 : vector<8x128xf32>
    %134 = arith.negf %133 : vector<8x128xf32>
    %135 = math.exp %134 : vector<8x128xf32>
    %cst_24 = arith.constant 1.000000e+00 : f32
    %136 = vector.broadcast %cst_24 : f32 to vector<8x128xf32>
    %137 = arith.addf %136, %135 : vector<8x128xf32>
    %138 = arith.divf %136, %137 : vector<8x128xf32>
    %139 = math.tanh %133 : vector<8x128xf32>
    %140 = vector.extract_strided_slice %138 {offsets = [0, 0], sizes = [8, 32], strides = [1, 1]} : vector<8x128xf32> to vector<8x32xf32>
    %141 = vector.extract_strided_slice %138 {offsets = [0, 32], sizes = [8, 32], strides = [1, 1]} : vector<8x128xf32> to vector<8x32xf32>
    %142 = vector.extract_strided_slice %139 {offsets = [0, 64], sizes = [8, 32], strides = [1, 1]} : vector<8x128xf32> to vector<8x32xf32>
    %143 = vector.extract_strided_slice %138 {offsets = [0, 96], sizes = [8, 32], strides = [1, 1]} : vector<8x128xf32> to vector<8x32xf32>
    %144 = arith.mulf %141, %127 : vector<8x32xf32>
    %145 = arith.mulf %140, %142 : vector<8x32xf32>
    %146 = arith.addf %144, %145 : vector<8x32xf32>
    %147 = math.tanh %146 : vector<8x32xf32>
    %148 = arith.mulf %143, %147 : vector<8x32xf32>
    %149 = vector.extract_strided_slice %12 {offsets = [56, 0], sizes = [8, 128], strides = [1, 1]} : vector<64x128xf32> to vector<8x128xf32>
    %150 = arith.truncf %148 : vector<8x32xf32> to vector<8x32xbf16>
    %cst_25 = arith.constant dense<0.000000e+00> : vector<8x128xf32>
    %151 = tpu.matmul %150, %13, %cst_25 {dimension_numbers = #tpu.dot_dimension_numbers<[1], [0], [0], [1], [0, 0, 1, 1], [], []>} : vector<8x32xbf16>, vector<32x128xbf16>, vector<8x128xf32> -> vector<8x128xf32>
    %152 = arith.addf %149, %151 : vector<8x128xf32>
    %153 = arith.negf %152 : vector<8x128xf32>
    %154 = math.exp %153 : vector<8x128xf32>
    %cst_26 = arith.constant 1.000000e+00 : f32
    %155 = vector.broadcast %cst_26 : f32 to vector<8x128xf32>
    %156 = arith.addf %155, %154 : vector<8x128xf32>
    %157 = arith.divf %155, %156 : vector<8x128xf32>
    %158 = math.tanh %152 : vector<8x128xf32>
    %159 = vector.extract_strided_slice %157 {offsets = [0, 0], sizes = [8, 32], strides = [1, 1]} : vector<8x128xf32> to vector<8x32xf32>
    %160 = vector.extract_strided_slice %157 {offsets = [0, 32], sizes = [8, 32], strides = [1, 1]} : vector<8x128xf32> to vector<8x32xf32>
    %161 = vector.extract_strided_slice %158 {offsets = [0, 64], sizes = [8, 32], strides = [1, 1]} : vector<8x128xf32> to vector<8x32xf32>
    %162 = vector.extract_strided_slice %157 {offsets = [0, 96], sizes = [8, 32], strides = [1, 1]} : vector<8x128xf32> to vector<8x32xf32>
    %163 = arith.mulf %160, %146 : vector<8x32xf32>
    %164 = arith.mulf %159, %161 : vector<8x32xf32>
    %165 = arith.addf %163, %164 : vector<8x32xf32>
    %166 = math.tanh %165 : vector<8x32xf32>
    %167 = arith.mulf %162, %166 : vector<8x32xf32>
    %168 = vector.extract_strided_slice %7 {offsets = [56, 0], sizes = [8, 50], strides = [1, 1]} : vector<64x50xbf16> to vector<8x50xbf16>
    %c0_27 = arith.constant 0 : index
    %c0_28 = arith.constant 0 : index
    %169 = vector.load %arg4[%c0_27, %c0_28] : memref<50x128xbf16, #tpu.memory_space<vmem>>, vector<50x128xbf16>
    %cst_29 = arith.constant dense<0.000000e+00> : vector<8x128xf32>
    %170 = tpu.matmul %168, %169, %cst_29 {dimension_numbers = #tpu.dot_dimension_numbers<[1], [0], [0], [1], [0, 0, 1, 1], [], []>} : vector<8x50xbf16>, vector<50x128xbf16>, vector<8x128xf32> -> vector<8x128xf32>
    %c0_30 = arith.constant 0 : index
    %c0_31 = arith.constant 0 : index
    %171 = vector.load %arg5[%c0_30, %c0_31] : memref<1x128xf32, #tpu.memory_space<vmem>>, vector<1x128xf32>
    %172 = vector.broadcast %171 : vector<1x128xf32> to vector<8x128xf32>
    %173 = arith.addf %170, %172 : vector<8x128xf32>
    %174 = arith.negf %173 : vector<8x128xf32>
    %175 = math.exp %174 : vector<8x128xf32>
    %cst_32 = arith.constant 1.000000e+00 : f32
    %176 = vector.broadcast %cst_32 : f32 to vector<8x128xf32>
    %177 = arith.addf %176, %175 : vector<8x128xf32>
    %178 = arith.divf %176, %177 : vector<8x128xf32>
    %179 = vector.extract_strided_slice %178 {offsets = [0, 0], sizes = [8, 32], strides = [1, 1]} : vector<8x128xf32> to vector<8x32xf32>
    %180 = vector.extract_strided_slice %178 {offsets = [0, 96], sizes = [8, 32], strides = [1, 1]} : vector<8x128xf32> to vector<8x32xf32>
    %181 = vector.extract_strided_slice %173 {offsets = [0, 64], sizes = [8, 32], strides = [1, 1]} : vector<8x128xf32> to vector<8x32xf32>
    %182 = math.tanh %181 : vector<8x32xf32>
    %183 = arith.mulf %179, %182 : vector<8x32xf32>
    %184 = math.tanh %183 : vector<8x32xf32>
    %185 = arith.mulf %180, %184 : vector<8x32xf32>
    %c0_33 = arith.constant 0 : index
    %c0_34 = arith.constant 0 : index
    %186 = vector.load %arg6[%c0_33, %c0_34] : memref<1x64xf32, #tpu.memory_space<vmem>>, vector<1x64xf32>
    %187 = vector.extract_strided_slice %186 {offsets = [0, 0], sizes = [1, 32], strides = [1, 1]} : vector<1x64xf32> to vector<1x32xf32>
    %188 = vector.broadcast %187 : vector<1x32xf32> to vector<8x32xf32>
    %189 = arith.mulf %167, %188 : vector<8x32xf32>
    %cst_35 = arith.constant dense<0.000000e+00> : vector<8xf32>
    %190 = vector.multi_reduction <add>, %189, %cst_35 [1] : vector<8x32xf32> to vector<8xf32>
    %191 = vector.shape_cast %190 : vector<8xf32> to vector<8x1xf32>
    %192 = vector.extract_strided_slice %186 {offsets = [0, 32], sizes = [1, 32], strides = [1, 1]} : vector<1x64xf32> to vector<1x32xf32>
    %193 = vector.broadcast %192 : vector<1x32xf32> to vector<8x32xf32>
    %194 = arith.mulf %185, %193 : vector<8x32xf32>
    %cst_36 = arith.constant dense<0.000000e+00> : vector<8xf32>
    %195 = vector.multi_reduction <add>, %194, %cst_36 [1] : vector<8x32xf32> to vector<8xf32>
    %196 = vector.shape_cast %195 : vector<8xf32> to vector<8x1xf32>
    %197 = arith.addf %191, %196 : vector<8x1xf32>
    %c0_37 = arith.constant 0 : index
    %c0_38 = arith.constant 0 : index
    %198 = vector.load %arg7[%c0_37, %c0_38] : memref<1x1xf32, #tpu.memory_space<vmem>>, vector<1x1xf32>
    %199 = vector.broadcast %198 : vector<1x1xf32> to vector<8x1xf32>
    %200 = arith.addf %197, %199 : vector<8x1xf32>
    %201 = arith.negf %200 : vector<8x1xf32>
    %202 = math.exp %201 : vector<8x1xf32>
    %cst_39 = arith.constant 1.000000e+00 : f32
    %203 = vector.broadcast %cst_39 : f32 to vector<8x1xf32>
    %204 = arith.addf %203, %202 : vector<8x1xf32>
    %205 = arith.divf %203, %204 : vector<8x1xf32>
    %206 = vector.extract_strided_slice %205 {offsets = [0, 0], sizes = [2, 1], strides = [1, 1]} : vector<8x1xf32> to vector<2x1xf32>
    %c0_40 = arith.constant 0 : index
    %c0_41 = arith.constant 0 : index
    %207 = vector.load %arg8[%c0_40, %c0_41] : memref<2x1xf32, #tpu.memory_space<vmem>>, vector<2x1xf32>
    tpu.vector_store %arg8[%c0_40, %c0_41], %206 {strides = array<i32>} : memref<2x1xf32, #tpu.memory_space<vmem>>, vector<2x1xf32>,
    return
  }
}

</mosaic_0001>

<llo_original>
// kernel: text_classifier_forward.1
$region0: #{text_classifier_forward.1}
  #allocation0 [shape = 'u32[]', space=smem, size = 0x4, offset = 0x4, fixed_abs, tag = 'smem constant byte address 0x4 - core index']
  #allocation1 [shape = 'u32[144,128]{1,0:T(1,128)}', space=vmem, size = 0x12000, scoped, tag = 'internal scratch']
  #allocation2 [shape = 'f32[1,1]{1,0:T(1,128)S(1)}', space=vmem, size = 0x200, scoped, tag = 'scoped memory for text_classifier_forward.1']
  %s0 = inlined_call_operand.vmem [shape: s32[64,1], index: 0, kind: input, shape index: {}]
  %s1 = inlined_call_operand.vmem [shape: bf16[50,128], index: 1, kind: input, shape index: {}]
  %s2 = inlined_call_operand.vmem [shape: bf16[32,128], index: 2, kind: input, shape index: {}]
  %s3 = inlined_call_operand.vmem [shape: f32[1,128], index: 3, kind: input, shape index: {}]
  %s4 = inlined_call_operand.vmem [shape: bf16[50,128], index: 4, kind: input, shape index: {}]
  %s5 = inlined_call_operand.vmem [shape: f32[1,128], index: 5, kind: input, shape index: {}]
  %s6 = inlined_call_operand.vmem [shape: f32[1,64], index: 6, kind: input, shape index: {}]
  %s7 = inlined_call_operand.<no memory space> [shape: f32[1,1], index: 7, kind: input, shape index: {}]
  %s8 = inlined_call_operand.vmem [shape: f32[2,1], index: 8, kind: output, shape index: {}]
  %s9 = sld [smem:[#allocation0]]
  $region42: #{text_classifier_forward.1} parent=0
    _
  %s11 = ssub.s32 1, %s9
  %s12 = scalar_select 0, %s11, %s9
  %v13 = vstv %s7
  %14 = vst [vmem:[#allocation2] sm:$0x1] %v13
  // Predicated region
  $region2: #{text_classifier_forward.1} parent=0 // pred_check
    _
  $region3: #{text_classifier_forward.1} parent=0 // pred_check_branch
    %16 = sbr.rel (0) target = $region5
  $region4: #{text_classifier_forward.1} parent=0 // pred_region
    _
  $region5: #{text_classifier_forward.1} parent=0 // pred_fallthru
    _
  // Predicated region
  $region6: #{text_classifier_forward.1} parent=0 // pred_check
    _
  $region7: #{text_classifier_forward.1} parent=0 // pred_check_branch
    %18 = sbr.rel (0) target = $region9
  $region8: #{text_classifier_forward.1} parent=0 // pred_region
    _
  $region9: #{text_classifier_forward.1} parent=0 // pred_fallthru
    _
  // Predicated region
  $region10: #{text_classifier_forward.1} parent=0 // pred_check
    _
  $region11: #{text_classifier_forward.1} parent=0 // pred_check_branch
    %20 = sbr.rel (0) target = $region13
  $region12: #{text_classifier_forward.1} parent=0 // pred_region
    _
  $region13: #{text_classifier_forward.1} parent=0 // pred_fallthru
    _
  // Predicated region
  $region14: #{text_classifier_forward.1} parent=0 // pred_check
    _
  $region15: #{text_classifier_forward.1} parent=0 // pred_check_branch
    %22 = sbr.rel (0) target = $region17
  $region16: #{text_classifier_forward.1} parent=0 // pred_region
    _
  $region17: #{text_classifier_forward.1} parent=0 // pred_fallthru
    _
  // Predicated region
  $region18: #{text_classifier_forward.1} parent=0 // pred_check
    _
  $region19: #{text_classifier_forward.1} parent=0 // pred_check_branch
    %24 = sbr.rel (0) target = $region21
  $region20: #{text_classifier_forward.1} parent=0 // pred_region
    _
  $region21: #{text_classifier_forward.1} parent=0 // pred_fallthru
    _
  // Predicated region
  $region22: #{text_classifier_forward.1} parent=0 // pred_check
    _
  $region23: #{text_classifier_forward.1} parent=0 // pred_check_branch
    %26 = sbr.rel (0) target = $region25
  $region24: #{text_classifier_forward.1} parent=0 // pred_region
    _
  $region25: #{text_classifier_forward.1} parent=0 // pred_fallthru
    _
  // Predicated region
  $region26: #{text_classifier_forward.1} parent=0 // pred_check
    _
  $region27: #{text_classifier_forward.1} parent=0 // pred_check_branch
    %28 = sbr.rel (0) target = $region29
  $region28: #{text_classifier_forward.1} parent=0 // pred_region
    _
  $region29: #{text_classifier_forward.1} parent=0 // pred_fallthru
    _
  // Predicated region
  $region30: #{text_classifier_forward.1} parent=0 // pred_check
    _
  $region31: #{text_classifier_forward.1} parent=0 // pred_check_branch
    %30 = sbr.rel (0) target = $region33
  $region32: #{text_classifier_forward.1} parent=0 // pred_region
    _
  $region33: #{text_classifier_forward.1} parent=0 // pred_fallthru
    _
  %v32 = vlaneseq
  %v33 = vand.u32 %v32, 127
  %v34 = vld [vmem:[%s0] sm:$0xff]
  %v35 = vld [vmem:[%s0 + $0x8] sm:$0xff]
  %v36 = vld [vmem:[%s0 + $0x10] sm:$0xff]
  %v37 = vld [vmem:[%s0 + $0x18] sm:$0xff]
  %v38 = vld [vmem:[%s0 + $0x20] sm:$0xff]
  %v39 = vld [vmem:[%s0 + $0x28] sm:$0xff]
  %v40 = vld [vmem:[%s0 + $0x30] sm:$0xff]
  %v41 = vld [vmem:[%s0 + $0x38] sm:$0xff]
  %42 = vset.pattern.permute.xlu0 0
  %43 = vperm.xlu0 %42, %v34
  %v44 = vpop.permute.xlu0 %43
  %45 = vset.pattern.permute.xlu0 0
  %46 = vperm.xlu0 %45, %v35
  %v47 = vpop.permute.xlu0 %46
  %48 = vset.pattern.permute.xlu0 0
  %49 = vperm.xlu0 %48, %v36
  %v50 = vpop.permute.xlu0 %49
  %51 = vset.pattern.permute.xlu0 0
  %52 = vperm.xlu0 %51, %v37
  %v53 = vpop.permute.xlu0 %52
  %54 = vset.pattern.permute.xlu0 0
  %55 = vperm.xlu0 %54, %v38
  %v56 = vpop.permute.xlu0 %55
  %57 = vset.pattern.permute.xlu0 0
  %58 = vperm.xlu0 %57, %v39
  %v59 = vpop.permute.xlu0 %58
  %60 = vset.pattern.permute.xlu0 0
  %61 = vperm.xlu0 %60, %v40
  %v62 = vpop.permute.xlu0 %61
  %63 = vset.pattern.permute.xlu0 0
  %64 = vperm.xlu0 %63, %v41
  %v65 = vpop.permute.xlu0 %64
  %vm66 = vcmp.eq.s32.totalorder %v44, %v33
  %vm67 = vcmp.eq.s32.totalorder %v47, %v33
  %vm68 = vcmp.eq.s32.totalorder %v50, %v33
  %vm69 = vcmp.eq.s32.totalorder %v53, %v33
  %vm70 = vcmp.eq.s32.totalorder %v56, %v33
  %vm71 = vcmp.eq.s32.totalorder %v59, %v33
  %vm72 = vcmp.eq.s32.totalorder %v62, %v33
  %vm73 = vcmp.eq.s32.totalorder %v65, %v33
  %v74 = vsel %vm66, 1.0, 0.0
  %v75 = vsel %vm67, 1.0, 0.0
  %v76 = vsel %vm68, 1.0, 0.0
  %v77 = vsel %vm69, 1.0, 0.0
  %v78 = vsel %vm70, 1.0, 0.0
  %v79 = vsel %vm71, 1.0, 0.0
  %v80 = vsel %vm72, 1.0, 0.0
  %v81 = vsel %vm73, 1.0, 0.0
  %v82 = vpack.c.bf16 %v75, %v74
  %v83 = vpack.c.bf16 %v77, %v76
  %v84 = vpack.c.bf16 %v79, %v78
  %v85 = vpack.c.bf16 %v81, %v80
  %v86 = vld [vmem:[%s1] sm:$0xf]
  %v87 = vld [vmem:[%s1 + $0x4] sm:$0xf]
  %v88 = vld [vmem:[%s1 + $0x8] sm:$0xf]
  %v89 = vld [vmem:[%s1 + $0xc] sm:$0xf]
  %v90 = vld [vmem:[%s1 + $0x10] sm:$0xf]
  %v91 = vld [vmem:[%s1 + $0x14] sm:$0xf]
  %v92 = vld [vmem:[%s1 + $0x18] sm:$0x1]
  %v93 = vld [vmem:[%s3] sm:$0x1]
  %v95 = vlaneseq
  %v96 = vshrl.u32 %v95, 7
  %v97 = vsub.s32 0, %v96
  %v98 = vrot.slane %v93, %v97
  %v107 = vunpack.c.l.b16 %v86
  %v108 = vunpack.c.l.b16 %v87
  %v109 = vunpack.c.l.b16 %v88
  %v110 = vunpack.c.l.b16 %v89
  %v111 = vunpack.c.l.b16 %v90
  %v112 = vunpack.c.l.b16 %v91
  %v113 = vunpack.c.l.b16 %v92
  %v114 = vpack.c.b16 %v108, %v107
  %v115 = vpack.c.b16 %v110, %v109
  %v116 = vpack.c.b16 %v112, %v111
  %v117 = vpack.c.b16 %v113, %v113
  %vm121 = vcmask 408576
  %v123 = vsel %vm121, %v82, 0
  %v126 = vsel %vm121, %v83, 0
  %v129 = vsel %vm121, %v84, 0
  %v132 = vsel %vm121, %v85, 0
  %vm134 = vcmask 1040384
  %v136 = vsel %vm134, %v117, 0
  %138 = vmatprep.subr.bf16.mxu0 0
  %139 = vmatpush1.bf16.msra.mxu0 %v114
  %140 = vmatprep.subr.bf16.mxu0 0
  %141 = vmatpush1.bf16.msra.mxu0 %v115
  %142 = vmatprep.subr.bf16.mxu0 0
  %143 = vmatpush1.bf16.msra.mxu0 %v116
  %144 = vmatprep.subr.bf16.mxu0 0
  %145 = vmatpush1.bf16.msra.mxu0 %v136
  %146 = vmatprep.subr.bf16.mxu0 0
  %147 = vmatpush1.bf16.msra.mxu0 0
  %148 = vmatprep.subr.bf16.mxu0 0
  %149 = vmatpush1.bf16.msra.mxu0 0
  %150 = vmatprep.subr.bf16.mxu0 0
  %151 = vmatpush1.bf16.msra.mxu0 0
  %152 = vmatprep.subr.bf16.mxu0 0
  %153 = vmatpush1.bf16.msra.mxu0 0
  %154 = vmatprep.subr.bf16.mxu0 0
  %155 = vmatpush1.bf16.msra.mxu0 0
  %156 = vmatprep.subr.bf16.mxu0 0
  %157 = vmatpush1.bf16.msra.mxu0 0
  %158 = vmatprep.subr.bf16.mxu0 0
  %159 = vmatpush1.bf16.msra.mxu0 0
  %160 = vmatprep.subr.bf16.mxu0 0
  %161 = vmatpush1.bf16.msra.mxu0 0
  %162 = vmatprep.subr.bf16.mxu0 0
  %163 = vmatpush1.bf16.msra.mxu0 0
  %164 = vmatprep.subr.bf16.mxu0 0
  %165 = vmatpush1.bf16.msra.mxu0 0
  %166 = vmatprep.subr.bf16.mxu0 0
  %167 = vmatpush1.bf16.msra.mxu0 0
  %168 = vmatprep.subr.bf16.mxu0 0
  %169 = vmatpush1.bf16.msra.mxu0 0
  %170 = vmatprep.mubr.bf16.mxu0 0
  %171 = vmatmul.mubr.bf16.gmra.mrb[0].mxu0 %v123
  %v172 = vpop.f32.mrb[0].mxu0
  %v173 = vadd.f32 %v98, %v172
  %v174 = vpop.f32.mrb[0].mxu0
  %v175 = vpop.f32.mrb[0].mxu0
  %v176 = vadd.f32 %v98, %v175
  %v177 = vpop.f32.mrb[0].mxu0
  %178 = vmatprep.mubr.bf16.mxu0 0
  %179 = vmatmul.mubr.bf16.gmra.mrb[0].mxu0 %v126
  %v180 = vpop.f32.mrb[0].mxu0
  %v181 = vadd.f32 %v98, %v180
  %v182 = vpop.f32.mrb[0].mxu0
  %v183 = vpop.f32.mrb[0].mxu0
  %v184 = vadd.f32 %v98, %v183
  %v185 = vpop.f32.mrb[0].mxu0
  %186 = vmatprep.mubr.bf16.mxu0 0
  %187 = vmatmul.mubr.bf16.gmra.mrb[0].mxu0 %v129
  %v188 = vpop.f32.mrb[0].mxu0
  %v189 = vadd.f32 %v98, %v188
  %v190 = vpop.f32.mrb[0].mxu0
  %v191 = vpop.f32.mrb[0].mxu0
  %v192 = vadd.f32 %v98, %v191
  %v193 = vpop.f32.mrb[0].mxu0
  %194 = vmatprep.mubr.bf16.mxu0 0
  %195 = vmatmul.mubr.bf16.gmra.mrb[0].mxu0 %v132
  %v196 = vpop.f32.mrb[0].mxu0
  %v197 = vadd.f32 %v98, %v196
  %v198 = vpop.f32.mrb[0].mxu0
  %v199 = vpop.f32.mrb[0].mxu0
  %v200 = vadd.f32 %v98, %v199
  %v201 = vpop.f32.mrb[0].mxu0
  %202 = vdwg.mxu0
  %v203 = vld [vmem:[%s2] sm:$0xf]
  %v204 = vld [vmem:[%s2 + $0x4] sm:$0xf]
  %v205 = vld [vmem:[%s2 + $0x8] sm:$0xf]
  %v206 = vld [vmem:[%s2 + $0xc] sm:$0xf]
  %v211 = vunpack.c.l.b16 %v203
  %v212 = vunpack.c.l.b16 %v204
  %v213 = vunpack.c.l.b16 %v205
  %v214 = vunpack.c.l.b16 %v206
  %v215 = vpack.c.b16 %v212, %v211
  %v216 = vpack.c.b16 %v214, %v213
  %vm219 = vcmask 261120
  %v221 = vsel %vm219, 0, 0
  %223 = vmatprep.subr.bf16.mxu0 0
  %224 = vmatpush1.bf16.msra.mxu0 %v215
  %225 = vmatprep.subr.bf16.mxu0 0
  %226 = vmatpush1.bf16.msra.mxu0 %v216
  %227 = vmatprep.subr.bf16.mxu0 0
  %228 = vmatpush1.bf16.msra.mxu0 0
  %229 = vmatprep.subr.bf16.mxu0 0
  %230 = vmatpush1.bf16.msra.mxu0 0
  %231 = vmatprep.subr.bf16.mxu0 0
  %232 = vmatpush1.bf16.msra.mxu0 0
  %233 = vmatprep.subr.bf16.mxu0 0
  %234 = vmatpush1.bf16.msra.mxu0 0
  %235 = vmatprep.subr.bf16.mxu0 0
  %236 = vmatpush1.bf16.msra.mxu0 0
  %237 = vmatprep.subr.bf16.mxu0 0
  %238 = vmatpush1.bf16.msra.mxu0 0
  %239 = vmatprep.subr.bf16.mxu0 0
  %240 = vmatpush1.bf16.msra.mxu0 0
  %241 = vmatprep.subr.bf16.mxu0 0
  %242 = vmatpush1.bf16.msra.mxu0 0
  %243 = vmatprep.subr.bf16.mxu0 0
  %244 = vmatpush1.bf16.msra.mxu0 0
  %245 = vmatprep.subr.bf16.mxu0 0
  %246 = vmatpush1.bf16.msra.mxu0 0
  %247 = vmatprep.subr.bf16.mxu0 0
  %248 = vmatpush1.bf16.msra.mxu0 0
  %249 = vmatprep.subr.bf16.mxu0 0
  %250 = vmatpush1.bf16.msra.mxu0 0
  %251 = vmatprep.subr.bf16.mxu0 0
  %252 = vmatpush1.bf16.msra.mxu0 0
  %253 = vmatprep.subr.bf16.mxu0 0
  %254 = vmatpush1.bf16.msra.mxu0 0
  %255 = vmatprep.mubr.bf16.mxu0 0
  %256 = vmatmul.mubr.bf16.gmra.mrb[0].mxu0 %v221
  %v257 = vpop.f32.mrb[0].mxu0
  %v258 = vadd.f32 0.0, %v257
  %v259 = vpop.f32.mrb[0].mxu0
  %v260 = vpop.f32.mrb[0].mxu0
  %v261 = vpop.f32.mrb[0].mxu0
  %262 = vdwg.mxu0
  %v263 = vadd.f32 %v173, %v258
  %v264 = vxor.u32 %v263, 2147483648
  %v265 = vmul.f32 %v264, 1.442695
  %v266 = vpow.pop %v265
  %v267 = vadd.f32 %v266, 1.0
  %v268 = vrcp.pop %v267
  %v269 = vmul.f32 1.0, %v268
  %v270 = vtanh.pop %v263
  %v271 = vmul.f32 %v269, 0.0
  %273 = vrot.lane.b32.xlu0 %v270, 64
  %v274 = vpop.permute.xlu0 %273
  %v276 = vmul.f32 %v269, %v274
  %278 = vrot.lane.b32.xlu0 %v276, 32
  %v279 = vpop.permute.xlu0 %278
  %v281 = vadd.f32 %v271, %v279
  %v282 = vtanh.pop %v281
  %284 = vrot.lane.b32.xlu0 %v282, 64
  %v285 = vpop.permute.xlu0 %284
  %v287 = vmul.f32 %v269, %v285
  %v288 = vpack.c.bf16 %v287, %v287
  %290 = vrot.lane.b32.xlu0 %v288, 32
  %v291 = vpop.permute.xlu0 %290
  %v293 = vsel %vm219, %v291, 0
  %295 = vmatprep.subr.bf16.mxu0 0
  %296 = vmatpush1.bf16.msra.mxu0 %v215
  %297 = vmatprep.subr.bf16.mxu0 0
  %298 = vmatpush1.bf16.msra.mxu0 %v216
  %299 = vmatprep.subr.bf16.mxu0 0
  %300 = vmatpush1.bf16.msra.mxu0 0
  %301 = vmatprep.subr.bf16.mxu0 0
  %302 = vmatpush1.bf16.msra.mxu0 0
  %303 = vmatprep.subr.bf16.mxu0 0
  %304 = vmatpush1.bf16.msra.mxu0 0
  %305 = vmatprep.subr.bf16.mxu0 0
  %306 = vmatpush1.bf16.msra.mxu0 0
  %307 = vmatprep.subr.bf16.mxu0 0
  %308 = vmatpush1.bf16.msra.mxu0 0
  %309 = vmatprep.subr.bf16.mxu0 0
  %310 = vmatpush1.bf16.msra.mxu0 0
  %311 = vmatprep.subr.bf16.mxu0 0
  %312 = vmatpush1.bf16.msra.mxu0 0
  %313 = vmatprep.subr.bf16.mxu0 0
  %314 = vmatpush1.bf16.msra.mxu0 0
  %315 = vmatprep.subr.bf16.mxu0 0
  %316 = vmatpush1.bf16.msra.mxu0 0
  %317 = vmatprep.subr.bf16.mxu0 0
  %318 = vmatpush1.bf16.msra.mxu0 0
  %319 = vmatprep.subr.bf16.mxu0 0
  %320 = vmatpush1.bf16.msra.mxu0 0
  %321 = vmatprep.subr.bf16.mxu0 0
  %322 = vmatpush1.bf16.msra.mxu0 0
  %323 = vmatprep.subr.bf16.mxu0 0
  %324 = vmatpush1.bf16.msra.mxu0 0
  %325 = vmatprep.subr.bf16.mxu0 0
  %326 = vmatpush1.bf16.msra.mxu0 0
  %327 = vmatprep.mubr.bf16.mxu0 0
  %328 = vmatmul.mubr.bf16.gmra.mrb[0].mxu0 %v293
  %v329 = vpop.f32.mrb[0].mxu0
  %v330 = vadd.f32 0.0, %v329
  %v331 = vpop.f32.mrb[0].mxu0
  %v332 = vpop.f32.mrb[0].mxu0
  %v333 = vpop.f32.mrb[0].mxu0
  %334 = vdwg.mxu0
  %v335 = vadd.f32 %v176, %v330
  %v336 = vxor.u32 %v335, 2147483648
  %v337 = vmul.f32 %v336, 1.442695
  %v338 = vpow.pop %v337
  %v339 = vadd.f32 %v338, 1.0
  %v340 = vrcp.pop %v339
  %v341 = vmul.f32 1.0, %v340
  %v342 = vtanh.pop %v335
  %v343 = vmul.f32 %v341, %v281
  %345 = vrot.lane.b32.xlu0 %v342, 64
  %v346 = vpop.permute.xlu0 %345
  %v348 = vmul.f32 %v341, %v346
  %350 = vrot.lane.b32.xlu0 %v348, 32
  %v351 = vpop.permute.xlu0 %350
  %v353 = vadd.f32 %v343, %v351
  %v354 = vtanh.pop %v353
  %356 = vrot.lane.b32.xlu0 %v354, 64
  %v357 = vpop.permute.xlu0 %356
  %v359 = vmul.f32 %v341, %v357
  %v360 = vpack.c.bf16 %v359, %v359
  %362 = vrot.lane.b32.xlu0 %v360, 32
  %v363 = vpop.permute.xlu0 %362
  %v365 = vsel %vm219, %v363, 0
  %367 = vmatprep.subr.bf16.mxu0 0
  %368 = vmatpush1.bf16.msra.mxu0 %v215
  %369 = vmatprep.subr.bf16.mxu0 0
  %370 = vmatpush1.bf16.msra.mxu0 %v216
  %371 = vmatprep.subr.bf16.mxu0 0
  %372 = vmatpush1.bf16.msra.mxu0 0
  %373 = vmatprep.subr.bf16.mxu0 0
  %374 = vmatpush1.bf16.msra.mxu0 0
  %375 = vmatprep.subr.bf16.mxu0 0
  %376 = vmatpush1.bf16.msra.mxu0 0
  %377 = vmatprep.subr.bf16.mxu0 0
  %378 = vmatpush1.bf16.msra.mxu0 0
  %379 = vmatprep.subr.bf16.mxu0 0
  %380 = vmatpush1.bf16.msra.mxu0 0
  %381 = vmatprep.subr.bf16.mxu0 0
  %382 = vmatpush1.bf16.msra.mxu0 0
  %383 = vmatprep.subr.bf16.mxu0 0
  %384 = vmatpush1.bf16.msra.mxu0 0
  %385 = vmatprep.subr.bf16.mxu0 0
  %386 = vmatpush1.bf16.msra.mxu0 0
  %387 = vmatprep.subr.bf16.mxu0 0
  %388 = vmatpush1.bf16.msra.mxu0 0
  %389 = vmatprep.subr.bf16.mxu0 0
  %390 = vmatpush1.bf16.msra.mxu0 0
  %391 = vmatprep.subr.bf16.mxu0 0
  %392 = vmatpush1.bf16.msra.mxu0 0
  %393 = vmatprep.subr.bf16.mxu0 0
  %394 = vmatpush1.bf16.msra.mxu0 0
  %395 = vmatprep.subr.bf16.mxu0 0
  %396 = vmatpush1.bf16.msra.mxu0 0
  %397 = vmatprep.subr.bf16.mxu0 0
  %398 = vmatpush1.bf16.msra.mxu0 0
  %399 = vmatprep.mubr.bf16.mxu0 0
  %400 = vmatmul.mubr.bf16.gmra.mrb[0].mxu0 %v365
  %v401 = vpop.f32.mrb[0].mxu0
  %v402 = vadd.f32 0.0, %v401
  %v403 = vpop.f32.mrb[0].mxu0
  %v404 = vpop.f32.mrb[0].mxu0
  %v405 = vpop.f32.mrb[0].mxu0
  %406 = vdwg.mxu0
  %v407 = vadd.f32 %v181, %v402
  %v408 = vxor.u32 %v407, 2147483648
  %v409 = vmul.f32 %v408, 1.442695
  %v410 = vpow.pop %v409
  %v411 = vadd.f32 %v410, 1.0
  %v412 = vrcp.pop %v411
  %v413 = vmul.f32 1.0, %v412
  %v414 = vtanh.pop %v407
  %v415 = vmul.f32 %v413, %v353
  %417 = vrot.lane.b32.xlu0 %v414, 64
  %v418 = vpop.permute.xlu0 %417
  %v420 = vmul.f32 %v413, %v418
  %422 = vrot.lane.b32.xlu0 %v420, 32
  %v423 = vpop.permute.xlu0 %422
  %v425 = vadd.f32 %v415, %v423
  %v426 = vtanh.pop %v425
  %428 = vrot.lane.b32.xlu0 %v426, 64
  %v429 = vpop.permute.xlu0 %428
  %v431 = vmul.f32 %v413, %v429
  %v432 = vpack.c.bf16 %v431, %v431
  %434 = vrot.lane.b32.xlu0 %v432, 32
  %v435 = vpop.permute.xlu0 %434
  %v437 = vsel %vm219, %v435, 0
  %439 = vmatprep.subr.bf16.mxu0 0
  %440 = vmatpush1.bf16.msra.mxu0 %v215
  %441 = vmatprep.subr.bf16.mxu0 0
  %442 = vmatpush1.bf16.msra.mxu0 %v216
  %443 = vmatprep.subr.bf16.mxu0 0
  %444 = vmatpush1.bf16.msra.mxu0 0
  %445 = vmatprep.subr.bf16.mxu0 0
  %446 = vmatpush1.bf16.msra.mxu0 0
  %447 = vmatprep.subr.bf16.mxu0 0
  %448 = vmatpush1.bf16.msra.mxu0 0
  %449 = vmatprep.subr.bf16.mxu0 0
  %450 = vmatpush1.bf16.msra.mxu0 0
  %451 = vmatprep.subr.bf16.mxu0 0
  %452 = vmatpush1.bf16.msra.mxu0 0
  %453 = vmatprep.subr.bf16.mxu0 0
  %454 = vmatpush1.bf16.msra.mxu0 0
  %455 = vmatprep.subr.bf16.mxu0 0
  %456 = vmatpush1.bf16.msra.mxu0 0
  %457 = vmatprep.subr.bf16.mxu0 0
  %458 = vmatpush1.bf16.msra.mxu0 0
  %459 = vmatprep.subr.bf16.mxu0 0
  %460 = vmatpush1.bf16.msra.mxu0 0
  %461 = vmatprep.subr.bf16.mxu0 0
  %462 = vmatpush1.bf16.msra.mxu0 0
  %463 = vmatprep.subr.bf16.mxu0 0
  %464 = vmatpush1.bf16.msra.mxu0 0
  %465 = vmatprep.subr.bf16.mxu0 0
  %466 = vmatpush1.bf16.msra.mxu0 0
  %467 = vmatprep.subr.bf16.mxu0 0
  %468 = vmatpush1.bf16.msra.mxu0 0
  %469 = vmatprep.subr.bf16.mxu0 0
  %470 = vmatpush1.bf16.msra.mxu0 0
  %471 = vmatprep.mubr.bf16.mxu0 0
  %472 = vmatmul.mubr.bf16.gmra.mrb[0].mxu0 %v437
  %v473 = vpop.f32.mrb[0].mxu0
  %v474 = vadd.f32 0.0, %v473
  %v475 = vpop.f32.mrb[0].mxu0
  %v476 = vpop.f32.mrb[0].mxu0
  %v477 = vpop.f32.mrb[0].mxu0
  %478 = vdwg.mxu0
  %v479 = vadd.f32 %v184, %v474
  %v480 = vxor.u32 %v479, 2147483648
  %v481 = vmul.f32 %v480, 1.442695
  %v482 = vpow.pop %v481
  %v483 = vadd.f32 %v482, 1.0
  %v484 = vrcp.pop %v483
  %v485 = vmul.f32 1.0, %v484
  %v486 = vtanh.pop %v479
  %v487 = vmul.f32 %v485, %v425
  %489 = vrot.lane.b32.xlu0 %v486, 64
  %v490 = vpop.permute.xlu0 %489
  %v492 = vmul.f32 %v485, %v490
  %494 = vrot.lane.b32.xlu0 %v492, 32
  %v495 = vpop.permute.xlu0 %494
  %v497 = vadd.f32 %v487, %v495
  %v498 = vtanh.pop %v497
  %500 = vrot.lane.b32.xlu0 %v498, 64
  %v501 = vpop.permute.xlu0 %500
  %v503 = vmul.f32 %v485, %v501
  %v504 = vpack.c.bf16 %v503, %v503
  %506 = vrot.lane.b32.xlu0 %v504, 32
  %v507 = vpop.permute.xlu0 %506
  %v509 = vsel %vm219, %v507, 0
  %511 = vmatprep.subr.bf16.mxu0 0
  %512 = vmatpush1.bf16.msra.mxu0 %v215
  %513 = vmatprep.subr.bf16.mxu0 0
  %514 = vmatpush1.bf16.msra.mxu0 %v216
  %515 = vmatprep.subr.bf16.mxu0 0
  %516 = vmatpush1.bf16.msra.mxu0 0
  %517 = vmatprep.subr.bf16.mxu0 0
  %518 = vmatpush1.bf16.msra.mxu0 0
  %519 = vmatprep.subr.bf16.mxu0 0
  %520 = vmatpush1.bf16.msra.mxu0 0
  %521 = vmatprep.subr.bf16.mxu0 0
  %522 = vmatpush1.bf16.msra.mxu0 0
  %523 = vmatprep.subr.bf16.mxu0 0
  %524 = vmatpush1.bf16.msra.mxu0 0
  %525 = vmatprep.subr.bf16.mxu0 0
  %526 = vmatpush1.bf16.msra.mxu0 0
  %527 = vmatprep.subr.bf16.mxu0 0
  %528 = vmatpush1.bf16.msra.mxu0 0
  %529 = vmatprep.subr.bf16.mxu0 0
  %530 = vmatpush1.bf16.msra.mxu0 0
  %531 = vmatprep.subr.bf16.mxu0 0
  %532 = vmatpush1.bf16.msra.mxu0 0
  %533 = vmatprep.subr.bf16.mxu0 0
  %534 = vmatpush1.bf16.msra.mxu0 0
  %535 = vmatprep.subr.bf16.mxu0 0
  %536 = vmatpush1.bf16.msra.mxu0 0
  %537 = vmatprep.subr.bf16.mxu0 0
  %538 = vmatpush1.bf16.msra.mxu0 0
  %539 = vmatprep.subr.bf16.mxu0 0
  %540 = vmatpush1.bf16.msra.mxu0 0
  %541 = vmatprep.subr.bf16.mxu0 0
  %542 = vmatpush1.bf16.msra.mxu0 0
  %543 = vmatprep.mubr.bf16.mxu0 0
  %544 = vmatmul.mubr.bf16.gmra.mrb[0].mxu0 %v509
  %v545 = vpop.f32.mrb[0].mxu0
  %v546 = vadd.f32 0.0, %v545
  %v547 = vpop.f32.mrb[0].mxu0
  %v548 = vpop.f32.mrb[0].mxu0
  %v549 = vpop.f32.mrb[0].mxu0
  %550 = vdwg.mxu0
  %v551 = vadd.f32 %v189, %v546
  %v552 = vxor.u32 %v551, 2147483648
  %v553 = vmul.f32 %v552, 1.442695
  %v554 = vpow.pop %v553
  %v555 = vadd.f32 %v554, 1.0
  %v556 = vrcp.pop %v555
  %v557 = vmul.f32 1.0, %v556
  %v558 = vtanh.pop %v551
  %v559 = vmul.f32 %v557, %v497
  %561 = vrot.lane.b32.xlu0 %v558, 64
  %v562 = vpop.permute.xlu0 %561
  %v564 = vmul.f32 %v557, %v562
  %566 = vrot.lane.b32.xlu0 %v564, 32
  %v567 = vpop.permute.xlu0 %566
  %v569 = vadd.f32 %v559, %v567
  %v570 = vtanh.pop %v569
  %572 = vrot.lane.b32.xlu0 %v570, 64
  %v573 = vpop.permute.xlu0 %572
  %v575 = vmul.f32 %v557, %v573
  %v576 = vpack.c.bf16 %v575, %v575
  %578 = vrot.lane.b32.xlu0 %v576, 32
  %v579 = vpop.permute.xlu0 %578
  %v581 = vsel %vm219, %v579, 0
  %583 = vmatprep.subr.bf16.mxu0 0
  %584 = vmatpush1.bf16.msra.mxu0 %v215
  %585 = vmatprep.subr.bf16.mxu0 0
  %586 = vmatpush1.bf16.msra.mxu0 %v216
  %587 = vmatprep.subr.bf16.mxu0 0
  %588 = vmatpush1.bf16.msra.mxu0 0
  %589 = vmatprep.subr.bf16.mxu0 0
  %590 = vmatpush1.bf16.msra.mxu0 0
  %591 = vmatprep.subr.bf16.mxu0 0
  %592 = vmatpush1.bf16.msra.mxu0 0
  %593 = vmatprep.subr.bf16.mxu0 0
  %594 = vmatpush1.bf16.msra.mxu0 0
  %595 = vmatprep.subr.bf16.mxu0 0
  %596 = vmatpush1.bf16.msra.mxu0 0
  %597 = vmatprep.subr.bf16.mxu0 0
  %598 = vmatpush1.bf16.msra.mxu0 0
  %599 = vmatprep.subr.bf16.mxu0 0
  %600 = vmatpush1.bf16.msra.mxu0 0
  %601 = vmatprep.subr.bf16.mxu0 0
  %602 = vmatpush1.bf16.msra.mxu0 0
  %603 = vmatprep.subr.bf16.mxu0 0
  %604 = vmatpush1.bf16.msra.mxu0 0
  %605 = vmatprep.subr.bf16.mxu0 0
  %606 = vmatpush1.bf16.msra.mxu0 0
  %607 = vmatprep.subr.bf16.mxu0 0
  %608 = vmatpush1.bf16.msra.mxu0 0
  %609 = vmatprep.subr.bf16.mxu0 0
  %610 = vmatpush1.bf16.msra.mxu0 0
  %611 = vmatprep.subr.bf16.mxu0 0
  %612 = vmatpush1.bf16.msra.mxu0 0
  %613 = vmatprep.subr.bf16.mxu0 0
  %614 = vmatpush1.bf16.msra.mxu0 0
  %615 = vmatprep.mubr.bf16.mxu0 0
  %616 = vmatmul.mubr.bf16.gmra.mrb[0].mxu0 %v581
  %v617 = vpop.f32.mrb[0].mxu0
  %v618 = vadd.f32 0.0, %v617
  %v619 = vpop.f32.mrb[0].mxu0
  %v620 = vpop.f32.mrb[0].mxu0
  %v621 = vpop.f32.mrb[0].mxu0
  %622 = vdwg.mxu0
  %v623 = vadd.f32 %v192, %v618
  %v624 = vxor.u32 %v623, 2147483648
  %v625 = vmul.f32 %v624, 1.442695
  %v626 = vpow.pop %v625
  %v627 = vadd.f32 %v626, 1.0
  %v628 = vrcp.pop %v627
  %v629 = vmul.f32 1.0, %v628
  %v630 = vtanh.pop %v623
  %v631 = vmul.f32 %v629, %v569
  %633 = vrot.lane.b32.xlu0 %v630, 64
  %v634 = vpop.permute.xlu0 %633
  %v636 = vmul.f32 %v629, %v634
  %638 = vrot.lane.b32.xlu0 %v636, 32
  %v639 = vpop.permute.xlu0 %638
  %v641 = vadd.f32 %v631, %v639
  %v642 = vtanh.pop %v641
  %644 = vrot.lane.b32.xlu0 %v642, 64
  %v645 = vpop.permute.xlu0 %644
  %v647 = vmul.f32 %v629, %v645
  %v648 = vpack.c.bf16 %v647, %v647
  %650 = vrot.lane.b32.xlu0 %v648, 32
  %v651 = vpop.permute.xlu0 %650
  %v653 = vsel %vm219, %v651, 0
  %655 = vmatprep.subr.bf16.mxu0 0
  %656 = vmatpush1.bf16.msra.mxu0 %v215
  %657 = vmatprep.subr.bf16.mxu0 0
  %658 = vmatpush1.bf16.msra.mxu0 %v216
  %659 = vmatprep.subr.bf16.mxu0 0
  %660 = vmatpush1.bf16.msra.mxu0 0
  %661 = vmatprep.subr.bf16.mxu0 0
  %662 = vmatpush1.bf16.msra.mxu0 0
  %663 = vmatprep.subr.bf16.mxu0 0
  %664 = vmatpush1.bf16.msra.mxu0 0
  %665 = vmatprep.subr.bf16.mxu0 0
  %666 = vmatpush1.bf16.msra.mxu0 0
  %667 = vmatprep.subr.bf16.mxu0 0
  %668 = vmatpush1.bf16.msra.mxu0 0
  %669 = vmatprep.subr.bf16.mxu0 0
  %670 = vmatpush1.bf16.msra.mxu0 0
  %671 = vmatprep.subr.bf16.mxu0 0
  %672 = vmatpush1.bf16.msra.mxu0 0
  %673 = vmatprep.subr.bf16.mxu0 0
  %674 = vmatpush1.bf16.msra.mxu0 0
  %675 = vmatprep.subr.bf16.mxu0 0
  %676 = vmatpush1.bf16.msra.mxu0 0
  %677 = vmatprep.subr.bf16.mxu0 0
  %678 = vmatpush1.bf16.msra.mxu0 0
  %679 = vmatprep.subr.bf16.mxu0 0
  %680 = vmatpush1.bf16.msra.mxu0 0
  %681 = vmatprep.subr.bf16.mxu0 0
  %682 = vmatpush1.bf16.msra.mxu0 0
  %683 = vmatprep.subr.bf16.mxu0 0
  %684 = vmatpush1.bf16.msra.mxu0 0
  %685 = vmatprep.subr.bf16.mxu0 0
  %686 = vmatpush1.bf16.msra.mxu0 0
  %687 = vmatprep.mubr.bf16.mxu0 0
  %688 = vmatmul.mubr.bf16.gmra.mrb[0].mxu0 %v653
  %v689 = vpop.f32.mrb[0].mxu0
  %v690 = vadd.f32 0.0, %v689
  %v691 = vpop.f32.mrb[0].mxu0
  %v692 = vpop.f32.mrb[0].mxu0
  %v693 = vpop.f32.mrb[0].mxu0
  %694 = vdwg.mxu0
  %v695 = vadd.f32 %v197, %v690
  %v696 = vxor.u32 %v695, 2147483648
  %v697 = vmul.f32 %v696, 1.442695
  %v698 = vpow.pop %v697
  %v699 = vadd.f32 %v698, 1.0
  %v700 = vrcp.pop %v699
  %v701 = vmul.f32 1.0, %v700
  %v702 = vtanh.pop %v695
  %v703 = vmul.f32 %v701, %v641
  %705 = vrot.lane.b32.xlu0 %v702, 64
  %v706 = vpop.permute.xlu0 %705
  %v708 = vmul.f32 %v701, %v706
  %710 = vrot.lane.b32.xlu0 %v708, 32
  %v711 = vpop.permute.xlu0 %710
  %v713 = vadd.f32 %v703, %v711
  %v714 = vtanh.pop %v713
  %716 = vrot.lane.b32.xlu0 %v714, 64
  %v717 = vpop.permute.xlu0 %716
  %v719 = vmul.f32 %v701, %v717
  %v720 = vpack.c.bf16 %v719, %v719
  %722 = vrot.lane.b32.xlu0 %v720, 32
  %v723 = vpop.permute.xlu0 %722
  %v725 = vsel %vm219, %v723, 0
  %727 = vmatprep.subr.bf16.mxu0 0
  %728 = vmatpush1.bf16.msra.mxu0 %v215
  %729 = vmatprep.subr.bf16.mxu0 0
  %730 = vmatpush1.bf16.msra.mxu0 %v216
  %731 = vmatprep.subr.bf16.mxu0 0
  %732 = vmatpush1.bf16.msra.mxu0 0
  %733 = vmatprep.subr.bf16.mxu0 0
  %734 = vmatpush1.bf16.msra.mxu0 0
  %735 = vmatprep.subr.bf16.mxu0 0
  %736 = vmatpush1.bf16.msra.mxu0 0
  %737 = vmatprep.subr.bf16.mxu0 0
  %738 = vmatpush1.bf16.msra.mxu0 0
  %739 = vmatprep.subr.bf16.mxu0 0
  %740 = vmatpush1.bf16.msra.mxu0 0
  %741 = vmatprep.subr.bf16.mxu0 0
  %742 = vmatpush1.bf16.msra.mxu0 0
  %743 = vmatprep.subr.bf16.mxu0 0
  %744 = vmatpush1.bf16.msra.mxu0 0
  %745 = vmatprep.subr.bf16.mxu0 0
  %746 = vmatpush1.bf16.msra.mxu0 0
  %747 = vmatprep.subr.bf16.mxu0 0
  %748 = vmatpush1.bf16.msra.mxu0 0
  %749 = vmatprep.subr.bf16.mxu0 0
  %750 = vmatpush1.bf16.msra.mxu0 0
  %751 = vmatprep.subr.bf16.mxu0 0
  %752 = vmatpush1.bf16.msra.mxu0 0
  %753 = vmatprep.subr.bf16.mxu0 0
  %754 = vmatpush1.bf16.msra.mxu0 0
  %755 = vmatprep.subr.bf16.mxu0 0
  %756 = vmatpush1.bf16.msra.mxu0 0
  %757 = vmatprep.subr.bf16.mxu0 0
  %758 = vmatpush1.bf16.msra.mxu0 0
  %759 = vmatprep.mubr.bf16.mxu0 0
  %760 = vmatmul.mubr.bf16.gmra.mrb[0].mxu0 %v725
  %v761 = vpop.f32.mrb[0].mxu0
  %v762 = vadd.f32 0.0, %v761
  %v763 = vpop.f32.mrb[0].mxu0
  %v764 = vpop.f32.mrb[0].mxu0
  %v765 = vpop.f32.mrb[0].mxu0
  %766 = vdwg.mxu0
  %v767 = vadd.f32 %v200, %v762
  %v768 = vxor.u32 %v767, 2147483648
  %v769 = vmul.f32 %v768, 1.442695
  %v770 = vpow.pop %v769
  %v771 = vadd.f32 %v770, 1.0
  %v772 = vrcp.pop %v771
  %v773 = vmul.f32 1.0, %v772
  %v774 = vtanh.pop %v767
  %v775 = vmul.f32 %v773, %v713
  %777 = vrot.lane.b32.xlu0 %v774, 64
  %v778 = vpop.permute.xlu0 %777
  %v780 = vmul.f32 %v773, %v778
  %782 = vrot.lane.b32.xlu0 %v780, 32
  %v783 = vpop.permute.xlu0 %782
  %v785 = vadd.f32 %v775, %v783
  %v786 = vtanh.pop %v785
  %788 = vrot.lane.b32.xlu0 %v786, 64
  %v789 = vpop.permute.xlu0 %788
  %v791 = vmul.f32 %v773, %v789
  %v792 = vld [vmem:[%s4] sm:$0xf]
  %v793 = vld [vmem:[%s4 + $0x4] sm:$0xf]
  %v794 = vld [vmem:[%s4 + $0x8] sm:$0xf]
  %v795 = vld [vmem:[%s4 + $0xc] sm:$0xf]
  %v796 = vld [vmem:[%s4 + $0x10] sm:$0xf]
  %v797 = vld [vmem:[%s4 + $0x14] sm:$0xf]
  %v798 = vld [vmem:[%s4 + $0x18] sm:$0x1]
  %v799 = vld [vmem:[%s5] sm:$0x1]
  %v801 = vlaneseq
  %v802 = vshrl.u32 %v801, 7
  %v803 = vsub.s32 0, %v802
  %v804 = vrot.slane %v799, %v803
  %v807 = vrot.slane %v85, 4
  %v815 = vunpack.c.l.b16 %v792
  %v816 = vunpack.c.l.b16 %v793
  %v817 = vunpack.c.l.b16 %v794
  %v818 = vunpack.c.l.b16 %v795
  %v819 = vunpack.c.l.b16 %v796
  %v820 = vunpack.c.l.b16 %v797
  %v821 = vunpack.c.l.b16 %v798
  %v822 = vpack.c.b16 %v816, %v815
  %v823 = vpack.c.b16 %v818, %v817
  %v824 = vpack.c.b16 %v820, %v819
  %v825 = vpack.c.b16 %v821, %v821
  %v830 = vsel %vm121, %v807, 0
  %v833 = vsel %vm134, %v825, 0
  %835 = vmatprep.subr.bf16.mxu0 0
  %836 = vmatpush1.bf16.msra.mxu0 %v822
  %837 = vmatprep.subr.bf16.mxu0 0
  %838 = vmatpush1.bf16.msra.mxu0 %v823
  %839 = vmatprep.subr.bf16.mxu0 0
  %840 = vmatpush1.bf16.msra.mxu0 %v824
  %841 = vmatprep.subr.bf16.mxu0 0
  %842 = vmatpush1.bf16.msra.mxu0 %v833
  %843 = vmatprep.subr.bf16.mxu0 0
  %844 = vmatpush1.bf16.msra.mxu0 0
  %845 = vmatprep.subr.bf16.mxu0 0
  %846 = vmatpush1.bf16.msra.mxu0 0
  %847 = vmatprep.subr.bf16.mxu0 0
  %848 = vmatpush1.bf16.msra.mxu0 0
  %849 = vmatprep.subr.bf16.mxu0 0
  %850 = vmatpush1.bf16.msra.mxu0 0
  %851 = vmatprep.subr.bf16.mxu0 0
  %852 = vmatpush1.bf16.msra.mxu0 0
  %853 = vmatprep.subr.bf16.mxu0 0
  %854 = vmatpush1.bf16.msra.mxu0 0
  %855 = vmatprep.subr.bf16.mxu0 0
  %856 = vmatpush1.bf16.msra.mxu0 0
  %857 = vmatprep.subr.bf16.mxu0 0
  %858 = vmatpush1.bf16.msra.mxu0 0
  %859 = vmatprep.subr.bf16.mxu0 0
  %860 = vmatpush1.bf16.msra.mxu0 0
  %861 = vmatprep.subr.bf16.mxu0 0
  %862 = vmatpush1.bf16.msra.mxu0 0
  %863 = vmatprep.subr.bf16.mxu0 0
  %864 = vmatpush1.bf16.msra.mxu0 0
  %865 = vmatprep.subr.bf16.mxu0 0
  %866 = vmatpush1.bf16.msra.mxu0 0
  %867 = vmatprep.mubr.bf16.mxu0 0
  %868 = vmatmul.mubr.bf16.gmra.mrb[0].mxu0 %v830
  %v869 = vpop.f32.mrb[0].mxu0
  %v870 = vadd.f32 %v804, %v869
  %v871 = vpop.f32.mrb[0].mxu0
  %v872 = vpop.f32.mrb[0].mxu0
  %v873 = vpop.f32.mrb[0].mxu0
  %874 = vdwg.mxu0
  %v875 = vxor.u32 %v870, 2147483648
  %v876 = vmul.f32 %v875, 1.442695
  %v877 = vpow.pop %v876
  %v878 = vadd.f32 %v877, 1.0
  %v879 = vrcp.pop %v878
  %v880 = vmul.f32 1.0, %v879
  %v881 = vtanh.pop %v870
  %883 = vrot.lane.b32.xlu0 %v881, 64
  %v884 = vpop.permute.xlu0 %883
  %v886 = vmul.f32 %v880, %v884
  %v887 = vtanh.pop %v886
  %889 = vrot.lane.b32.xlu0 %v887, 96
  %v890 = vpop.permute.xlu0 %889
  %v892 = vmul.f32 %v880, %v890
  %v893 = vld [vmem:[%s6] sm:$0x1]
  %v895 = vlaneseq
  %v896 = vshrl.u32 %v895, 7
  %v897 = vsub.s32 0, %v896
  %v898 = vrot.slane %v893, %v897
  %899 = vrot.lane.b32.xlu0 %v898, 96
  %v900 = vpop.permute.xlu0 %899
  %v902 = vmul.f32 %v791, %v900
  %904 = vrot.lane.b32.xlu0 %v902, 32
  %v905 = vpop.permute.xlu0 %904
  %v907 = vsel %vm219, %v905, 0.0
  %908 = vadd.xlane.f32.xlu0 %v907
  %v909 = vpop.xlane.xlu0 %908
  %910 = vrot.lane.b32.xlu0 %v898, 64
  %v911 = vpop.permute.xlu0 %910
  %v913 = vmul.f32 %v892, %v911
  %915 = vrot.lane.b32.xlu0 %v913, 32
  %v916 = vpop.permute.xlu0 %915
  %v918 = vsel %vm219, %v916, 0.0
  %919 = vadd.xlane.f32.xlu0 %v918
  %v920 = vpop.xlane.xlu0 %919
  %v921 = vadd.f32 %v909, %v920
  %v922 = vld [vmem:[#allocation2] sm:$0x1]
  %v924 = vlaneseq
  %v925 = vshrl.u32 %v924, 7
  %v926 = vsub.s32 0, %v925
  %v927 = vrot.slane %v922, %v926
  %v929 = vadd.f32 %v921, %v927
  %v930 = vxor.u32 %v929, 2147483648
  %v931 = vmul.f32 %v930, 1.442695
  %v932 = vpow.pop %v931
  %v933 = vadd.f32 %v932, 1.0
  %v934 = vrcp.pop %v933
  %v935 = vmul.f32 1.0, %v934
  %vm936 = vcmask 1024
  %937 = vst.msk [vmem:[%s8] sm:$0x3] %vm936, %v935
  // Predicated region
  $region34: #{text_classifier_forward.1} parent=0 // pred_check
    _
  $region35: #{text_classifier_forward.1} parent=0 // pred_check_branch
    %939 = sbr.rel (0) target = $region37
  $region36: #{text_classifier_forward.1} parent=0 // pred_region
    _
  $region37: #{text_classifier_forward.1} parent=0 // pred_fallthru
    _
  // Predicated region
  $region38: #{text_classifier_forward.1} parent=0 // pred_check
    _
  $region39: #{text_classifier_forward.1} parent=0 // pred_check_branch
    %941 = sbr.rel (0) target = $region41
  $region40: #{text_classifier_forward.1} parent=0 // pred_region
    _
  $region41: #{text_classifier_forward.1} parent=0 // pred_fallthru
    _

</llo_original>
